<compile_context>
chip_gen: v5e
topology: v5e:2x2
jax: 0.10.0
libtpu: 0.0.40
codegen_flags: <defaults>
</compile_context>

<pallas_src>
import functools

import jax
import jax.numpy as jnp
from jax.experimental import pallas as pl
from jax.experimental.pallas import tpu as pltpu

_EPS = 1e-10
_HALF_LOG_2PI = 0.9189385332046727  # 0.5 * log(2*pi)

# Lanczos (g=7, 9-term) coefficients, valid for z > 0 (all args here are > 0).
_LANCZOS_G = 7.0
_LANCZOS_COEF = (
    0.99999999999980993,
    676.5203681218851,
    -1259.1392167224028,
    771.32342877765313,
    -176.61502916214059,
    12.507343278686905,
    -0.13857109526572012,
    9.9843695780195716e-6,
    1.5056327351493116e-7,
)


def _lanczos_rational():
    """Fold the Lanczos partial-fraction sum over a common denominator.

    A(z) = c0 + sum_i c_i/(z+i)  ==  num(z) / den(z), with
    den(z) = prod_{i=1..8}(z+i).  Coefficients are computed once in float64
    at import time (offline w.r.t. the kernel) and embedded as constants.
    """
    def mul(p, q):
        out = [0.0] * (len(p) + len(q) - 1)
        for a, pa in enumerate(p):
            for b, qb in enumerate(q):
                out[a + b] += pa * qb
        return out

    den = [1.0]
    for i in range(1, 9):
        den = mul(den, [float(i), 1.0])
    num = [_LANCZOS_COEF[0] * c for c in den]
    for i in range(1, 9):
        p = [1.0]
        for j in range(1, 9):
            if j != i:
                p = mul(p, [float(j), 1.0])
        p = p + [0.0] * (len(den) - len(p))
        num = [a + _LANCZOS_COEF[i] * b for a, b in zip(num, p)]
    return tuple(num), tuple(den)


_LG_NUM, _LG_DEN = _lanczos_rational()


def _horner(z, coeffs_ascending):
    acc = jnp.full_like(z, coeffs_ascending[-1])
    for c in reversed(coeffs_ascending[:-1]):
        acc = acc * z + c
    return acc


def _lgamma(z):
    """lgamma(z) for z > 0: rational Lanczos, 3 EUP logs, rest on the VPU.

    # TODO(synk): f32 Horner of the degree-8 polynomials overflows for
    # z > ~6e4 and lgamma differences lose f32 precision for very large
    # counts; fine for typical expression-count ranges.
    """
    zm1 = z - 1.0
    num = _horner(zm1, _LG_NUM)
    den = _horner(zm1, _LG_DEN)
    t = zm1 + (_LANCZOS_G + 0.5)
    return _HALF_LOG_2PI + (zm1 + 0.5) * jnp.log(t) - t + jnp.log(num) - jnp.log(den)


def _mixture_nb_kernel(x_ref, m1_ref, m2_ref, disp_ref, pi_ref, sf_ref, out_ref):
    # out_ref is a (tile_n, 1) per-row partial-sum block, resident across the
    # gene ("arbitrary") grid axis; zero it on the first gene block.
    @pl.when(pl.program_id(1) == 0)
    def _():
        out_ref[...] = jnp.zeros_like(out_ref)

    x = x_ref[...]
    sf = sf_ref[...]                          # (tile_n, 1) -> lane broadcast
    mean1 = m1_ref[...] * sf
    mean2 = m2_ref[...] * sf
    disp = disp_ref[...]
    pi_logits = pi_ref[...]

    disp_eps = disp + _EPS
    log_disp_eps = jnp.log(disp_eps)

    # t1 = lgamma(disp+eps) + lgamma(x+1) - lgamma(x+disp+eps)
    t1 = _lgamma(disp_eps) + _lgamma(x + 1.0) - _lgamma(x + disp_eps)

    # NB log terms, with log(1 + mean/disp_eps) = log(disp_eps + mean) - log(disp_eps)
    disp_plus_x = disp + x
    t2_1 = (disp_plus_x * (jnp.log(disp_eps + mean1) - log_disp_eps)
            + x * (log_disp_eps - jnp.log(mean1 + _EPS)))
    t2_2 = (disp_plus_x * (jnp.log(disp_eps + mean2) - log_disp_eps)
            + x * (log_disp_eps - jnp.log(mean2 + _EPS)))

    # logsumexp(-(t1+t2_1), -(t1+t2_2) - pi) with t1 factored out:
    #   lse(a, b) = max(a, b) + log1p(exp(-|a - b|))
    a = -t2_1
    b = -t2_2 - pi_logits
    lse_inner = jnp.maximum(a, b) + jnp.log1p(jnp.exp(-jnp.abs(a - b)))
    logsumexp = lse_inner - t1

    # softplus(-pi), numerically stable (one exp + one log).
    softplus_neg_pi = jnp.maximum(-pi_logits, 0.0) + jnp.log1p(jnp.exp(-jnp.abs(pi_logits)))

    # -log_mixture_nb = softplus(-pi) - logsumexp
    neg_log_mixture = softplus_neg_pi - logsumexp

    # Lane (XLU) reduce to per-row partials; accumulate in the resident block.
    out_ref[...] += jnp.sum(neg_log_mixture, axis=-1, keepdims=True)


def _pick_tile(dim, candidates):
    for c in candidates:
        if dim % c == 0:
            return c
    return dim  # fall back to the full (unblocked) dimension


@functools.partial(jax.jit, static_argnames=("tile_n", "tile_g"))
def mixture_nb_loss(x, mean1, mean2, disp, pi_logits, scale_factor=None,
                    *, tile_n=None, tile_g=None):
    """Pallas implementation of MixtureNBLoss.forward. Returns a scalar."""
    x = x.astype(jnp.float32)
    mean1 = mean1.astype(jnp.float32)
    mean2 = mean2.astype(jnp.float32)
    disp = disp.astype(jnp.float32)
    pi_logits = pi_logits.astype(jnp.float32)

    n, g = x.shape
    if tile_g is None:
        tile_g = _pick_tile(g, (512, 256, 128))
    if tile_n is None:
        tile_n = _pick_tile(n, (256, 128, 64, 32, 16, 8))
    # TODO(synk): non-multiple N/G fall back to a single full-extent block;
    # a masked ragged-tile path is not implemented (padded lanes would
    # otherwise contribute spurious loss).
    assert n % tile_n == 0 and g % tile_g == 0

    if scale_factor is None:
        sf = jnp.ones((n, 1), dtype=jnp.float32)
    else:
        sf = scale_factor.astype(jnp.float32).reshape(n, 1)

    grid = (n // tile_n, g // tile_g)
    tile_spec = pl.BlockSpec((tile_n, tile_g), lambda i, j: (i, j))
    sf_spec = pl.BlockSpec((tile_n, 1), lambda i, j: (i, 0))
    out_spec = pl.BlockSpec((tile_n, 1), lambda i, j: (i, 0))

    # VMEM budget: 5 double-buffered (tile_n, tile_g) inputs + small sf/out
    # blocks; cap well under v7x's 64 MiB while raising v5e's 16 MiB default.
    footprint = 2 * (5 * tile_n * tile_g * 4 + 2 * tile_n * 4)
    vmem_limit = int(min(max(3 * footprint + (8 << 20), 32 << 20), 48 << 20))

    partials = pl.pallas_call(
        _mixture_nb_kernel,
        out_shape=jax.ShapeDtypeStruct((n, 1), jnp.float32),
        grid_spec=pltpu.PrefetchScalarGridSpec(
            num_scalar_prefetch=0,
            grid=grid,
            in_specs=[tile_spec, tile_spec, tile_spec, tile_spec, tile_spec,
                      sf_spec],
            out_specs=out_spec,
        ),
        compiler_params=pltpu.CompilerParams(
            dimension_semantics=("parallel", "arbitrary"),
            vmem_limit_bytes=vmem_limit),
    )(x, mean1, mean2, disp, pi_logits, sf)
    return jnp.sum(partials)


def _reference_loss(x, mean1, mean2, disp, pi_logits, scale_factor=None):
    """Pure-JAX reference mirroring the PyTorch forward exactly."""
    eps = 1e-10
    if scale_factor is not None:
        sf = scale_factor[:, None]
        mean1 = mean1 * sf
        mean2 = mean2 * sf
    lg = jax.lax.lgamma
    t1 = lg(disp + eps) + lg(x + 1.0) - lg(x + disp + eps)
    t2_1 = (disp + x) * jnp.log(1.0 + mean1 / (disp + eps)) + x * (
        jnp.log(disp + eps) - jnp.log(mean1 + eps))
    t2_2 = (disp + x) * jnp.log(1.0 + mean2 / (disp + eps)) + x * (
        jnp.log(disp + eps) - jnp.log(mean2 + eps))
    log_nb_1 = t1 + t2_1
    log_nb_2 = t1 + t2_2
    stacked = jnp.stack((-log_nb_1, -log_nb_2 - pi_logits))
    logsumexp = jax.scipy.special.logsumexp(stacked, axis=0)
    softplus_pi = jax.nn.softplus(-pi_logits)
    return jnp.sum(-(logsumexp - softplus_pi))


if __name__ == "__main__":
    key = jax.random.PRNGKey(0)
    k_x, k_m1, k_m2, k_d, k_pi, k_sf = jax.random.split(key, 6)

    N, G = 16, 512  # small shapes: 16 cells x 512 genes

    # Non-negative counts and strictly positive means / dispersion.
    x = jnp.floor(jax.random.uniform(k_x, (N, G), minval=0.0, maxval=30.0))
    mean1 = jnp.exp(0.7 * jax.random.normal(k_m1, (N, G))) + 0.1
    mean2 = jnp.exp(0.7 * jax.random.normal(k_m2, (N, G))) + 0.1
    disp = jnp.exp(0.5 * jax.random.normal(k_d, (N, G))) + 0.1
    pi_logits = jax.random.normal(k_pi, (N, G))
    scale_factor = jax.random.uniform(k_sf, (N,), minval=0.5, maxval=1.5)

    ref = jax.block_until_ready(
        _reference_loss(x, mean1, mean2, disp, pi_logits, scale_factor))

    # 1) Explicit small tiles -> grid (2, 4): exercises the parallel row axis
    #    and the per-row accumulation over gene blocks.
    out_tiled = jax.block_until_ready(
        mixture_nb_loss(x, mean1, mean2, disp, pi_logits, scale_factor,
                        tile_n=8, tile_g=128))
    # 2) Default (auto) tiles.
    out_auto = jax.block_until_ready(
        mixture_nb_loss(x, mean1, mean2, disp, pi_logits, scale_factor))

    for name, out in (("tiled", out_tiled), ("auto", out_auto)):
        rel_err = abs(float(out) - float(ref)) / (abs(float(ref)) + 1e-12)
        if rel_err > 5e-3:
            raise AssertionError(
                f"{name} mismatch: pallas={float(out)} ref={float(ref)} "
                f"rel_err={rel_err}")

    print("KERNEL_OK")
</pallas_src>

<mosaic_0001>
module attributes {stable_mosaic.version = 11 : i64} {
  func.func @_mixture_nb_kernel(%arg0: i32, %arg1: i32, %arg2: memref<8x128xf32, #tpu.memory_space<vmem>>, %arg3: memref<8x128xf32, #tpu.memory_space<vmem>>, %arg4: memref<8x128xf32, #tpu.memory_space<vmem>>, %arg5: memref<8x128xf32, #tpu.memory_space<vmem>>, %arg6: memref<8x128xf32, #tpu.memory_space<vmem>>, %arg7: memref<8x1xf32, #tpu.memory_space<vmem>>, %arg8: memref<8x1xf32, #tpu.memory_space<vmem>>) attributes {dimension_semantics = [#tpu.dimension_semantics<parallel>, #tpu.dimension_semantics<arbitrary>], iteration_bounds = array<i64: 2, 4>, scalar_prefetch = 0 : i64, scratch_operands = 0 : i64, tpu.core_type = #tpu.core_type<tc>, window_params = [{transform_indices = @transform_0, window_bounds = array<i64: 8, 128>}, {transform_indices = @transform_1, window_bounds = array<i64: 8, 128>}, {transform_indices = @transform_2, window_bounds = array<i64: 8, 128>}, {transform_indices = @transform_3, window_bounds = array<i64: 8, 128>}, {transform_indices = @transform_4, window_bounds = array<i64: 8, 128>}, {transform_indices = @transform_5, window_bounds = array<i64: 8, 1>}, {transform_indices = @transform_6, window_bounds = array<i64: 8, 1>}]} {
    %c0_i32 = arith.constant 0 : i32
    %0 = arith.cmpi eq, %arg1, %c0_i32 : i32
    %1 = arith.extui %0 : i1 to i32
    %c0_i32_0 = arith.constant 0 : i32
    %2 = arith.cmpi ne, %1, %c0_i32_0 : i32
    scf.if %2 {
      %cst_92 = arith.constant 0.000000e+00 : f32
      %267 = vector.broadcast %cst_92 : f32 to vector<8x1xf32>
      %c0_93 = arith.constant 0 : index
      %c0_94 = arith.constant 0 : index
      %268 = vector.load %arg8[%c0_93, %c0_94] : memref<8x1xf32, #tpu.memory_space<vmem>>, vector<8x1xf32>
      tpu.vector_store %arg8[%c0_93, %c0_94], %267 {strides = array<i32>} : memref<8x1xf32, #tpu.memory_space<vmem>>, vector<8x1xf32>,
    } else {
    }
    %c0 = arith.constant 0 : index
    %c0_1 = arith.constant 0 : index
    %3 = vector.load %arg2[%c0, %c0_1] : memref<8x128xf32, #tpu.memory_space<vmem>>, vector<8x128xf32>
    %c0_2 = arith.constant 0 : index
    %c0_3 = arith.constant 0 : index
    %4 = vector.load %arg7[%c0_2, %c0_3] : memref<8x1xf32, #tpu.memory_space<vmem>>, vector<8x1xf32>
    %c0_4 = arith.constant 0 : index
    %c0_5 = arith.constant 0 : index
    %5 = vector.load %arg3[%c0_4, %c0_5] : memref<8x128xf32, #tpu.memory_space<vmem>>, vector<8x128xf32>
    %6 = vector.broadcast %4 : vector<8x1xf32> to vector<8x128xf32>
    %7 = arith.mulf %5, %6 : vector<8x128xf32>
    %c0_6 = arith.constant 0 : index
    %c0_7 = arith.constant 0 : index
    %8 = vector.load %arg4[%c0_6, %c0_7] : memref<8x128xf32, #tpu.memory_space<vmem>>, vector<8x128xf32>
    %9 = vector.broadcast %4 : vector<8x1xf32> to vector<8x128xf32>
    %10 = arith.mulf %8, %9 : vector<8x128xf32>
    %c0_8 = arith.constant 0 : index
    %c0_9 = arith.constant 0 : index
    %11 = vector.load %arg5[%c0_8, %c0_9] : memref<8x128xf32, #tpu.memory_space<vmem>>, vector<8x128xf32>
    %c0_10 = arith.constant 0 : index
    %c0_11 = arith.constant 0 : index
    %12 = vector.load %arg6[%c0_10, %c0_11] : memref<8x128xf32, #tpu.memory_space<vmem>>, vector<8x128xf32>
    %cst = arith.constant 1.000000e-10 : f32
    %13 = vector.broadcast %cst : f32 to vector<8x128xf32>
    %14 = arith.addf %11, %13 : vector<8x128xf32>
    %15 = math.log %14 : vector<8x128xf32>
    %cst_12 = arith.constant 1.000000e+00 : f32
    %16 = vector.broadcast %cst_12 : f32 to vector<8x128xf32>
    %17 = arith.subf %14, %16 : vector<8x128xf32>
    %cst_13 = arith.constant 1.000000e+00 : f32
    %18 = vector.broadcast %cst_13 : f32 to vector<8x128xf32>
    %19 = arith.mulf %18, %17 : vector<8x128xf32>
    %cst_14 = arith.constant 60.4583321 : f32
    %20 = vector.broadcast %cst_14 : f32 to vector<8x128xf32>
    %21 = arith.addf %19, %20 : vector<8x128xf32>
    %22 = arith.mulf %21, %17 : vector<8x128xf32>
    %cst_15 = arith.constant 1599.04248 : f32
    %23 = vector.broadcast %cst_15 : f32 to vector<8x128xf32>
    %24 = arith.addf %22, %23 : vector<8x128xf32>
    %25 = arith.mulf %24, %17 : vector<8x128xf32>
    %cst_16 = arith.constant 24165.5098 : f32
    %26 = vector.broadcast %cst_16 : f32 to vector<8x128xf32>
    %27 = arith.addf %25, %26 : vector<8x128xf32>
    %28 = arith.mulf %27, %17 : vector<8x128xf32>
    %cst_17 = arith.constant 228235.219 : f32
    %29 = vector.broadcast %cst_17 : f32 to vector<8x128xf32>
    %30 = arith.addf %28, %29 : vector<8x128xf32>
    %31 = arith.mulf %30, %17 : vector<8x128xf32>
    %cst_18 = arith.constant 1379496.25 : f32
    %32 = vector.broadcast %cst_18 : f32 to vector<8x128xf32>
    %33 = arith.addf %31, %32 : vector<8x128xf32>
    %34 = arith.mulf %33, %17 : vector<8x128xf32>
    %cst_19 = arith.constant 0x4A9F05EA : f32
    %35 = vector.broadcast %cst_19 : f32 to vector<8x128xf32>
    %36 = arith.addf %34, %35 : vector<8x128xf32>
    %37 = arith.mulf %36, %17 : vector<8x128xf32>
    %cst_20 = arith.constant 0x4B2B9D51 : f32
    %38 = vector.broadcast %cst_20 : f32 to vector<8x128xf32>
    %39 = arith.addf %37, %38 : vector<8x128xf32>
    %40 = arith.mulf %39, %17 : vector<8x128xf32>
    %cst_21 = arith.constant 0x4B220ADA : f32
    %41 = vector.broadcast %cst_21 : f32 to vector<8x128xf32>
    %42 = arith.addf %40, %41 : vector<8x128xf32>
    %cst_22 = arith.constant 1.000000e+00 : f32
    %43 = vector.broadcast %cst_22 : f32 to vector<8x128xf32>
    %44 = arith.mulf %43, %17 : vector<8x128xf32>
    %cst_23 = arith.constant 3.600000e+01 : f32
    %45 = vector.broadcast %cst_23 : f32 to vector<8x128xf32>
    %46 = arith.addf %44, %45 : vector<8x128xf32>
    %47 = arith.mulf %46, %17 : vector<8x128xf32>
    %cst_24 = arith.constant 5.460000e+02 : f32
    %48 = vector.broadcast %cst_24 : f32 to vector<8x128xf32>
    %49 = arith.addf %47, %48 : vector<8x128xf32>
    %50 = arith.mulf %49, %17 : vector<8x128xf32>
    %cst_25 = arith.constant 4.536000e+03 : f32
    %51 = vector.broadcast %cst_25 : f32 to vector<8x128xf32>
    %52 = arith.addf %50, %51 : vector<8x128xf32>
    %53 = arith.mulf %52, %17 : vector<8x128xf32>
    %cst_26 = arith.constant 2.244900e+04 : f32
    %54 = vector.broadcast %cst_26 : f32 to vector<8x128xf32>
    %55 = arith.addf %53, %54 : vector<8x128xf32>
    %56 = arith.mulf %55, %17 : vector<8x128xf32>
    %cst_27 = arith.constant 6.728400e+04 : f32
    %57 = vector.broadcast %cst_27 : f32 to vector<8x128xf32>
    %58 = arith.addf %56, %57 : vector<8x128xf32>
    %59 = arith.mulf %58, %17 : vector<8x128xf32>
    %cst_28 = arith.constant 1.181240e+05 : f32
    %60 = vector.broadcast %cst_28 : f32 to vector<8x128xf32>
    %61 = arith.addf %59, %60 : vector<8x128xf32>
    %62 = arith.mulf %61, %17 : vector<8x128xf32>
    %cst_29 = arith.constant 1.095840e+05 : f32
    %63 = vector.broadcast %cst_29 : f32 to vector<8x128xf32>
    %64 = arith.addf %62, %63 : vector<8x128xf32>
    %65 = arith.mulf %64, %17 : vector<8x128xf32>
    %cst_30 = arith.constant 4.032000e+04 : f32
    %66 = vector.broadcast %cst_30 : f32 to vector<8x128xf32>
    %67 = arith.addf %65, %66 : vector<8x128xf32>
    %cst_31 = arith.constant 7.500000e+00 : f32
    %68 = vector.broadcast %cst_31 : f32 to vector<8x128xf32>
    %69 = arith.addf %17, %68 : vector<8x128xf32>
    %cst_32 = arith.constant 5.000000e-01 : f32
    %70 = vector.broadcast %cst_32 : f32 to vector<8x128xf32>
    %71 = arith.addf %17, %70 : vector<8x128xf32>
    %72 = math.log %69 : vector<8x128xf32>
    %73 = arith.mulf %71, %72 : vector<8x128xf32>
    %cst_33 = arith.constant 0.918938517 : f32
    %74 = vector.broadcast %cst_33 : f32 to vector<8x128xf32>
    %75 = arith.addf %74, %73 : vector<8x128xf32>
    %76 = arith.subf %75, %69 : vector<8x128xf32>
    %77 = math.log %42 : vector<8x128xf32>
    %78 = arith.addf %76, %77 : vector<8x128xf32>
    %79 = math.log %67 : vector<8x128xf32>
    %80 = arith.subf %78, %79 : vector<8x128xf32>
    %cst_34 = arith.constant 1.000000e+00 : f32
    %81 = vector.broadcast %cst_34 : f32 to vector<8x128xf32>
    %82 = arith.addf %3, %81 : vector<8x128xf32>
    %cst_35 = arith.constant 1.000000e+00 : f32
    %83 = vector.broadcast %cst_35 : f32 to vector<8x128xf32>
    %84 = arith.subf %82, %83 : vector<8x128xf32>
    %cst_36 = arith.constant 1.000000e+00 : f32
    %85 = vector.broadcast %cst_36 : f32 to vector<8x128xf32>
    %86 = arith.mulf %85, %84 : vector<8x128xf32>
    %cst_37 = arith.constant 60.4583321 : f32
    %87 = vector.broadcast %cst_37 : f32 to vector<8x128xf32>
    %88 = arith.addf %86, %87 : vector<8x128xf32>
    %89 = arith.mulf %88, %84 : vector<8x128xf32>
    %cst_38 = arith.constant 1599.04248 : f32
    %90 = vector.broadcast %cst_38 : f32 to vector<8x128xf32>
    %91 = arith.addf %89, %90 : vector<8x128xf32>
    %92 = arith.mulf %91, %84 : vector<8x128xf32>
    %cst_39 = arith.constant 24165.5098 : f32
    %93 = vector.broadcast %cst_39 : f32 to vector<8x128xf32>
    %94 = arith.addf %92, %93 : vector<8x128xf32>
    %95 = arith.mulf %94, %84 : vector<8x128xf32>
    %cst_40 = arith.constant 228235.219 : f32
    %96 = vector.broadcast %cst_40 : f32 to vector<8x128xf32>
    %97 = arith.addf %95, %96 : vector<8x128xf32>
    %98 = arith.mulf %97, %84 : vector<8x128xf32>
    %cst_41 = arith.constant 1379496.25 : f32
    %99 = vector.broadcast %cst_41 : f32 to vector<8x128xf32>
    %100 = arith.addf %98, %99 : vector<8x128xf32>
    %101 = arith.mulf %100, %84 : vector<8x128xf32>
    %cst_42 = arith.constant 0x4A9F05EA : f32
    %102 = vector.broadcast %cst_42 : f32 to vector<8x128xf32>
    %103 = arith.addf %101, %102 : vector<8x128xf32>
    %104 = arith.mulf %103, %84 : vector<8x128xf32>
    %cst_43 = arith.constant 0x4B2B9D51 : f32
    %105 = vector.broadcast %cst_43 : f32 to vector<8x128xf32>
    %106 = arith.addf %104, %105 : vector<8x128xf32>
    %107 = arith.mulf %106, %84 : vector<8x128xf32>
    %cst_44 = arith.constant 0x4B220ADA : f32
    %108 = vector.broadcast %cst_44 : f32 to vector<8x128xf32>
    %109 = arith.addf %107, %108 : vector<8x128xf32>
    %cst_45 = arith.constant 1.000000e+00 : f32
    %110 = vector.broadcast %cst_45 : f32 to vector<8x128xf32>
    %111 = arith.mulf %110, %84 : vector<8x128xf32>
    %cst_46 = arith.constant 3.600000e+01 : f32
    %112 = vector.broadcast %cst_46 : f32 to vector<8x128xf32>
    %113 = arith.addf %111, %112 : vector<8x128xf32>
    %114 = arith.mulf %113, %84 : vector<8x128xf32>
    %cst_47 = arith.constant 5.460000e+02 : f32
    %115 = vector.broadcast %cst_47 : f32 to vector<8x128xf32>
    %116 = arith.addf %114, %115 : vector<8x128xf32>
    %117 = arith.mulf %116, %84 : vector<8x128xf32>
    %cst_48 = arith.constant 4.536000e+03 : f32
    %118 = vector.broadcast %cst_48 : f32 to vector<8x128xf32>
    %119 = arith.addf %117, %118 : vector<8x128xf32>
    %120 = arith.mulf %119, %84 : vector<8x128xf32>
    %cst_49 = arith.constant 2.244900e+04 : f32
    %121 = vector.broadcast %cst_49 : f32 to vector<8x128xf32>
    %122 = arith.addf %120, %121 : vector<8x128xf32>
    %123 = arith.mulf %122, %84 : vector<8x128xf32>
    %cst_50 = arith.constant 6.728400e+04 : f32
    %124 = vector.broadcast %cst_50 : f32 to vector<8x128xf32>
    %125 = arith.addf %123, %124 : vector<8x128xf32>
    %126 = arith.mulf %125, %84 : vector<8x128xf32>
    %cst_51 = arith.constant 1.181240e+05 : f32
    %127 = vector.broadcast %cst_51 : f32 to vector<8x128xf32>
    %128 = arith.addf %126, %127 : vector<8x128xf32>
    %129 = arith.mulf %128, %84 : vector<8x128xf32>
    %cst_52 = arith.constant 1.095840e+05 : f32
    %130 = vector.broadcast %cst_52 : f32 to vector<8x128xf32>
    %131 = arith.addf %129, %130 : vector<8x128xf32>
    %132 = arith.mulf %131, %84 : vector<8x128xf32>
    %cst_53 = arith.constant 4.032000e+04 : f32
    %133 = vector.broadcast %cst_53 : f32 to vector<8x128xf32>
    %134 = arith.addf %132, %133 : vector<8x128xf32>
    %cst_54 = arith.constant 7.500000e+00 : f32
    %135 = vector.broadcast %cst_54 : f32 to vector<8x128xf32>
    %136 = arith.addf %84, %135 : vector<8x128xf32>
    %cst_55 = arith.constant 5.000000e-01 : f32
    %137 = vector.broadcast %cst_55 : f32 to vector<8x128xf32>
    %138 = arith.addf %84, %137 : vector<8x128xf32>
    %139 = math.log %136 : vector<8x128xf32>
    %140 = arith.mulf %138, %139 : vector<8x128xf32>
    %cst_56 = arith.constant 0.918938517 : f32
    %141 = vector.broadcast %cst_56 : f32 to vector<8x128xf32>
    %142 = arith.addf %141, %140 : vector<8x128xf32>
    %143 = arith.subf %142, %136 : vector<8x128xf32>
    %144 = math.log %109 : vector<8x128xf32>
    %145 = arith.addf %143, %144 : vector<8x128xf32>
    %146 = math.log %134 : vector<8x128xf32>
    %147 = arith.subf %145, %146 : vector<8x128xf32>
    %148 = arith.addf %80, %147 : vector<8x128xf32>
    %149 = arith.addf %3, %14 : vector<8x128xf32>
    %cst_57 = arith.constant 1.000000e+00 : f32
    %150 = vector.broadcast %cst_57 : f32 to vector<8x128xf32>
    %151 = arith.subf %149, %150 : vector<8x128xf32>
    %cst_58 = arith.constant 1.000000e+00 : f32
    %152 = vector.broadcast %cst_58 : f32 to vector<8x128xf32>
    %153 = arith.mulf %152, %151 : vector<8x128xf32>
    %cst_59 = arith.constant 60.4583321 : f32
    %154 = vector.broadcast %cst_59 : f32 to vector<8x128xf32>
    %155 = arith.addf %153, %154 : vector<8x128xf32>
    %156 = arith.mulf %155, %151 : vector<8x128xf32>
    %cst_60 = arith.constant 1599.04248 : f32
    %157 = vector.broadcast %cst_60 : f32 to vector<8x128xf32>
    %158 = arith.addf %156, %157 : vector<8x128xf32>
    %159 = arith.mulf %158, %151 : vector<8x128xf32>
    %cst_61 = arith.constant 24165.5098 : f32
    %160 = vector.broadcast %cst_61 : f32 to vector<8x128xf32>
    %161 = arith.addf %159, %160 : vector<8x128xf32>
    %162 = arith.mulf %161, %151 : vector<8x128xf32>
    %cst_62 = arith.constant 228235.219 : f32
    %163 = vector.broadcast %cst_62 : f32 to vector<8x128xf32>
    %164 = arith.addf %162, %163 : vector<8x128xf32>
    %165 = arith.mulf %164, %151 : vector<8x128xf32>
    %cst_63 = arith.constant 1379496.25 : f32
    %166 = vector.broadcast %cst_63 : f32 to vector<8x128xf32>
    %167 = arith.addf %165, %166 : vector<8x128xf32>
    %168 = arith.mulf %167, %151 : vector<8x128xf32>
    %cst_64 = arith.constant 0x4A9F05EA : f32
    %169 = vector.broadcast %cst_64 : f32 to vector<8x128xf32>
    %170 = arith.addf %168, %169 : vector<8x128xf32>
    %171 = arith.mulf %170, %151 : vector<8x128xf32>
    %cst_65 = arith.constant 0x4B2B9D51 : f32
    %172 = vector.broadcast %cst_65 : f32 to vector<8x128xf32>
    %173 = arith.addf %171, %172 : vector<8x128xf32>
    %174 = arith.mulf %173, %151 : vector<8x128xf32>
    %cst_66 = arith.constant 0x4B220ADA : f32
    %175 = vector.broadcast %cst_66 : f32 to vector<8x128xf32>
    %176 = arith.addf %174, %175 : vector<8x128xf32>
    %cst_67 = arith.constant 1.000000e+00 : f32
    %177 = vector.broadcast %cst_67 : f32 to vector<8x128xf32>
    %178 = arith.mulf %177, %151 : vector<8x128xf32>
    %cst_68 = arith.constant 3.600000e+01 : f32
    %179 = vector.broadcast %cst_68 : f32 to vector<8x128xf32>
    %180 = arith.addf %178, %179 : vector<8x128xf32>
    %181 = arith.mulf %180, %151 : vector<8x128xf32>
    %cst_69 = arith.constant 5.460000e+02 : f32
    %182 = vector.broadcast %cst_69 : f32 to vector<8x128xf32>
    %183 = arith.addf %181, %182 : vector<8x128xf32>
    %184 = arith.mulf %183, %151 : vector<8x128xf32>
    %cst_70 = arith.constant 4.536000e+03 : f32
    %185 = vector.broadcast %cst_70 : f32 to vector<8x128xf32>
    %186 = arith.addf %184, %185 : vector<8x128xf32>
    %187 = arith.mulf %186, %151 : vector<8x128xf32>
    %cst_71 = arith.constant 2.244900e+04 : f32
    %188 = vector.broadcast %cst_71 : f32 to vector<8x128xf32>
    %189 = arith.addf %187, %188 : vector<8x128xf32>
    %190 = arith.mulf %189, %151 : vector<8x128xf32>
    %cst_72 = arith.constant 6.728400e+04 : f32
    %191 = vector.broadcast %cst_72 : f32 to vector<8x128xf32>
    %192 = arith.addf %190, %191 : vector<8x128xf32>
    %193 = arith.mulf %192, %151 : vector<8x128xf32>
    %cst_73 = arith.constant 1.181240e+05 : f32
    %194 = vector.broadcast %cst_73 : f32 to vector<8x128xf32>
    %195 = arith.addf %193, %194 : vector<8x128xf32>
    %196 = arith.mulf %195, %151 : vector<8x128xf32>
    %cst_74 = arith.constant 1.095840e+05 : f32
    %197 = vector.broadcast %cst_74 : f32 to vector<8x128xf32>
    %198 = arith.addf %196, %197 : vector<8x128xf32>
    %199 = arith.mulf %198, %151 : vector<8x128xf32>
    %cst_75 = arith.constant 4.032000e+04 : f32
    %200 = vector.broadcast %cst_75 : f32 to vector<8x128xf32>
    %201 = arith.addf %199, %200 : vector<8x128xf32>
    %cst_76 = arith.constant 7.500000e+00 : f32
    %202 = vector.broadcast %cst_76 : f32 to vector<8x128xf32>
    %203 = arith.addf %151, %202 : vector<8x128xf32>
    %cst_77 = arith.constant 5.000000e-01 : f32
    %204 = vector.broadcast %cst_77 : f32 to vector<8x128xf32>
    %205 = arith.addf %151, %204 : vector<8x128xf32>
    %206 = math.log %203 : vector<8x128xf32>
    %207 = arith.mulf %205, %206 : vector<8x128xf32>
    %cst_78 = arith.constant 0.918938517 : f32
    %208 = vector.broadcast %cst_78 : f32 to vector<8x128xf32>
    %209 = arith.addf %208, %207 : vector<8x128xf32>
    %210 = arith.subf %209, %203 : vector<8x128xf32>
    %211 = math.log %176 : vector<8x128xf32>
    %212 = arith.addf %210, %211 : vector<8x128xf32>
    %213 = math.log %201 : vector<8x128xf32>
    %214 = arith.subf %212, %213 : vector<8x128xf32>
    %215 = arith.subf %148, %214 : vector<8x128xf32>
    %216 = arith.addf %11, %3 : vector<8x128xf32>
    %217 = arith.addf %14, %7 : vector<8x128xf32>
    %218 = math.log %217 : vector<8x128xf32>
    %219 = arith.subf %218, %15 : vector<8x128xf32>
    %220 = arith.mulf %216, %219 : vector<8x128xf32>
    %cst_79 = arith.constant 1.000000e-10 : f32
    %221 = vector.broadcast %cst_79 : f32 to vector<8x128xf32>
    %222 = arith.addf %7, %221 : vector<8x128xf32>
    %223 = math.log %222 : vector<8x128xf32>
    %224 = arith.subf %15, %223 : vector<8x128xf32>
    %225 = arith.mulf %3, %224 : vector<8x128xf32>
    %226 = arith.addf %220, %225 : vector<8x128xf32>
    %227 = arith.addf %14, %10 : vector<8x128xf32>
    %228 = math.log %227 : vector<8x128xf32>
    %229 = arith.subf %228, %15 : vector<8x128xf32>
    %230 = arith.mulf %216, %229 : vector<8x128xf32>
    %cst_80 = arith.constant 1.000000e-10 : f32
    %231 = vector.broadcast %cst_80 : f32 to vector<8x128xf32>
    %232 = arith.addf %10, %231 : vector<8x128xf32>
    %233 = math.log %232 : vector<8x128xf32>
    %234 = arith.subf %15, %233 : vector<8x128xf32>
    %235 = arith.mulf %3, %234 : vector<8x128xf32>
    %236 = arith.addf %230, %235 : vector<8x128xf32>
    %cst_81 = arith.constant 0.000000e+00 : f32
    %237 = vector.broadcast %cst_81 : f32 to vector<8x128xf32>
    %238 = arith.subf %237, %226 : vector<8x128xf32>
    %cst_82 = arith.constant 0.000000e+00 : f32
    %239 = vector.broadcast %cst_82 : f32 to vector<8x128xf32>
    %240 = arith.subf %239, %236 : vector<8x128xf32>
    %241 = arith.subf %240, %12 : vector<8x128xf32>
    %242 = arith.maximumf %238, %241 : vector<8x128xf32>
    %243 = arith.subf %238, %241 : vector<8x128xf32>
    %244 = math.absf %243 : vector<8x128xf32>
    %cst_83 = arith.constant 0.000000e+00 : f32
    %245 = vector.broadcast %cst_83 : f32 to vector<8x128xf32>
    %246 = arith.subf %245, %244 : vector<8x128xf32>
    %247 = math.exp %246 : vector<8x128xf32>
    %248 = math.log1p %247 : vector<8x128xf32>
    %249 = arith.addf %242, %248 : vector<8x128xf32>
    %250 = arith.subf %249, %215 : vector<8x128xf32>
    %cst_84 = arith.constant 0.000000e+00 : f32
    %251 = vector.broadcast %cst_84 : f32 to vector<8x128xf32>
    %252 = arith.subf %251, %12 : vector<8x128xf32>
    %cst_85 = arith.constant 0.000000e+00 : f32
    %253 = vector.broadcast %cst_85 : f32 to vector<8x128xf32>
    %254 = arith.maximumf %252, %253 : vector<8x128xf32>
    %255 = math.absf %12 : vector<8x128xf32>
    %cst_86 = arith.constant 0.000000e+00 : f32
    %256 = vector.broadcast %cst_86 : f32 to vector<8x128xf32>
    %257 = arith.subf %256, %255 : vector<8x128xf32>
    %258 = math.exp %257 : vector<8x128xf32>
    %259 = math.log1p %258 : vector<8x128xf32>
    %260 = arith.addf %254, %259 : vector<8x128xf32>
    %261 = arith.subf %260, %250 : vector<8x128xf32>
    %c0_87 = arith.constant 0 : index
    %c0_88 = arith.constant 0 : index
    %262 = vector.load %arg8[%c0_87, %c0_88] : memref<8x1xf32, #tpu.memory_space<vmem>>, vector<8x1xf32>
    %cst_89 = arith.constant dense<0.000000e+00> : vector<8xf32>
    %263 = vector.multi_reduction <add>, %261, %cst_89 [1] : vector<8x128xf32> to vector<8xf32>
    %264 = vector.shape_cast %263 : vector<8xf32> to vector<8x1xf32>
    %265 = arith.addf %262, %264 : vector<8x1xf32>
    %c0_90 = arith.constant 0 : index
    %c0_91 = arith.constant 0 : index
    %266 = vector.load %arg8[%c0_90, %c0_91] : memref<8x1xf32, #tpu.memory_space<vmem>>, vector<8x1xf32>
    tpu.vector_store %arg8[%c0_90, %c0_91], %265 {strides = array<i32>} : memref<8x1xf32, #tpu.memory_space<vmem>>, vector<8x1xf32>,
    return
  }
  func.func @transform_0(%arg0: i32, %arg1: i32) -> (i32, i32) {
    %c0_i32 = arith.constant 0 : i32
    return %arg0, %arg1 : i32, i32
  }
  func.func @transform_1(%arg0: i32, %arg1: i32) -> (i32, i32) {
    %c0_i32 = arith.constant 0 : i32
    return %arg0, %arg1 : i32, i32
  }
  func.func @transform_2(%arg0: i32, %arg1: i32) -> (i32, i32) {
    %c0_i32 = arith.constant 0 : i32
    return %arg0, %arg1 : i32, i32
  }
  func.func @transform_3(%arg0: i32, %arg1: i32) -> (i32, i32) {
    %c0_i32 = arith.constant 0 : i32
    return %arg0, %arg1 : i32, i32
  }
  func.func @transform_4(%arg0: i32, %arg1: i32) -> (i32, i32) {
    %c0_i32 = arith.constant 0 : i32
    return %arg0, %arg1 : i32, i32
  }
  func.func @transform_5(%arg0: i32, %arg1: i32) -> (i32, i32) {
    %c0_i32 = arith.constant 0 : i32
    %c0_i32_0 = arith.constant 0 : i32
    return %arg0, %c0_i32 : i32, i32
  }
  func.func @transform_6(%arg0: i32, %arg1: i32) -> (i32, i32) {
    %c0_i32 = arith.constant 0 : i32
    %c0_i32_0 = arith.constant 0 : i32
    return %arg0, %c0_i32 : i32, i32
  }
}

</mosaic_0001>

<llo_original>
// kernel: mixture_nb_loss.1
$region0: #{mixture_nb_loss.1}
  #allocation0 [shape = 'u32[]', space=smem, size = 0x4, offset = 0x4, fixed_abs, tag = 'smem constant byte address 0x4 - core index']
  #allocation1 [shape = 'u32[72,128]{1,0:T(1,128)}', space=vmem, size = 0x9000, scoped, tag = 'internal scratch']
  %s0 = inlined_call_operand.hbm [shape: f32[16,512], index: 0, kind: input, shape index: {}]
  %s1 = inlined_call_operand.hbm [shape: f32[16,512], index: 1, kind: input, shape index: {}]
  %s2 = inlined_call_operand.hbm [shape: f32[16,512], index: 2, kind: input, shape index: {}]
  %s3 = inlined_call_operand.hbm [shape: f32[16,512], index: 3, kind: input, shape index: {}]
  %s4 = inlined_call_operand.hbm [shape: f32[16,512], index: 4, kind: input, shape index: {}]
  %s5 = inlined_call_operand.vmem [shape: f32[16,1], index: 5, kind: input, shape index: {}]
  %s6 = inlined_call_operand.vmem [shape: f32[16,1], index: 6, kind: output, shape index: {}]
  %s7 = sld [smem:[#allocation0]]
  $region81: #{mixture_nb_loss.1} parent=0
    _
  %s9 = ssub.s32 1, %s7
  %s10 = scalar_select 0, %s9, %s7
  $region1: #{mixture_nb_loss.1} parent=0
    #allocation2 [shape = 'u8[8192]{0}', space=vmem, size = 0x2000, scoped, tag = 'input window, operand 0']
    #allocation3 [shape = 's32[2]{0}', space=sflag, size = 0x8, scoped, tag = 'scoped memory for mixture_nb_loss.1']
    #allocation4 [shape = 'u8[8192]{0}', space=vmem, size = 0x2000, scoped, tag = 'input window, operand 1']
    #allocation5 [shape = 's32[2]{0}', space=sflag, size = 0x8, scoped, tag = 'scoped memory for mixture_nb_loss.1']
    #allocation6 [shape = 'u8[8192]{0}', space=vmem, size = 0x2000, scoped, tag = 'input window, operand 2']
    #allocation7 [shape = 'u8[8192]{0}', space=vmem, size = 0x2000, scoped, tag = 'input window, operand 3']
    #allocation8 [shape = 's32[2]{0}', space=sflag, size = 0x8, scoped, tag = 'scoped memory for mixture_nb_loss.1']
    #allocation9 [shape = 'u8[8192]{0}', space=vmem, size = 0x2000, scoped, tag = 'input window, operand 4']
    %11 = vsyncpa [#allocation3], 0
    %s12 = scalar_lea.sflag [#allocation3], 1
    %13 = vsyncpa %s12, 0
    %14 = vsyncpa [#allocation5], 0
    %s15 = scalar_lea.sflag [#allocation5], 1
    %16 = vsyncpa %s15, 0
    %17 = vsyncpa [#allocation8], 0
    %s18 = scalar_lea.sflag [#allocation8], 1
    %19 = vsyncpa %s18, 0
    loop: start=0, step=1, limit=10
    $region2: #{mixture_nb_loss.1} parent=1 // loop_pre_header
      _
    $region3: #{mixture_nb_loss.1} parent=1 // loop_header
      %s21 = sphi 0, %s25
      %p22 = scmp.ge.s32.totalorder %s21, 10
      %s28 = sphi 0, %s40
      %s29 = sphi 0, %s36
      %s30 = sphi 0, %s28
      %s31 = sphi 0, %s29
      %s32 = sphi 0, %s30
      %s33 = sphi 0, %s31
      %s45 = sphi 0, %s47
      %s48 = sphi 0, %s45
      %s49 = sphi 0, %s48
      %s65 = sphi 0, %s49
      %s73 = sphi 0, %s75
      %s76 = sphi 0, %s73
      %s77 = sphi 0, %s76
      %s93 = sphi 0, %s77
      %s101 = sphi 0, %s103
      %s104 = sphi 0, %s101
      %s105 = sphi 0, %s104
      %s121 = sphi 0, %s105
      %s129 = sphi 0, %s131
      %s132 = sphi 0, %s129
      %s133 = sphi 0, %s132
      %s149 = sphi 0, %s133
      %s157 = sphi 0, %s159
      %s160 = sphi 0, %s157
      %s161 = sphi 0, %s160
      %s177 = sphi 0, %s161
      %s183 = sphi 0, %s185
      %s186 = sphi 0, %s183
      %s187 = sphi 0, %s186
      %s203 = sphi 0, %s187
      %s209 = sphi 0, %s211
      %s212 = sphi 0, %s209
      %s213 = sphi 0, %s212
      %s229 = sphi 0, %s213
    $region4: #{mixture_nb_loss.1} parent=1 // loop_header_branch
      %24 = sbr.rel (%p22) target = $region8
    $region5: #{mixture_nb_loss.1} parent=1 // loop_body
      %s26 = ssub.s32 %s21, 1
      %s27 = ssub.s32 %s21, 2
      %s34 = sadd.s32 1, %s29
      %p35 = scmp.ge.s32.totalorder %s34, 4
      %s36 = scalar_select %p35, 0, %s34
      %s37 = sadd.s32 1, %s28
      %s38 = scalar_select %p35, %s37, %s28
      %p39 = scmp.ge.s32.totalorder %s38, 2
      %s40 = scalar_select %p39, 0, %s38
      %s41 = ssub.s32 %s28, %s40
      %s42 = ssub.s32 %s29, %s36
      %s43 = sor.u32 %s41, %s42
      %p44 = scmp.eq.s32.totalorder %s43, 0
      %s46 = sadd.s32 %s45, 1
      %s47 = scalar_select %p44, %s45, %s46
      %p50 = pneg %p44
      %p51 = scmp.eq.s32.totalorder %s21, 7
      %p52 = por %p50, %p51
      %p53 = scmp.ne.s32.totalorder %s45, %s48
      %p54 = scmp.eq.s32.totalorder %s21, 0
      %p55 = por %p53, %p54
      %p56 = scmp.ne.s32.totalorder %s45, %s48
      %p57 = scmp.eq.s32.totalorder %s26, 7
      %p58 = por %p56, %p57
      %p59 = scmp.ne.s32.totalorder %s48, %s49
      %p60 = scmp.eq.s32.totalorder %s26, 0
      %p61 = por %p59, %p60
      %p62 = scmp.ne.s32.totalorder %s48, %s49
      %p63 = scmp.eq.s32.totalorder %s27, 7
      %p64 = por %p62, %p63
      %p66 = scmp.ne.s32.totalorder %s49, %s65
      %p67 = scmp.eq.s32.totalorder %s27, 0
      %p68 = por %p66, %p67
      %s69 = ssub.s32 %s28, %s40
      %s70 = ssub.s32 %s29, %s36
      %s71 = sor.u32 %s69, %s70
      %p72 = scmp.eq.s32.totalorder %s71, 0
      %s74 = sadd.s32 %s73, 1
      %s75 = scalar_select %p72, %s73, %s74
      %p78 = pneg %p72
      %p79 = scmp.eq.s32.totalorder %s21, 7
      %p80 = por %p78, %p79
      %p81 = scmp.ne.s32.totalorder %s73, %s76
      %p82 = scmp.eq.s32.totalorder %s21, 0
      %p83 = por %p81, %p82
      %p84 = scmp.ne.s32.totalorder %s73, %s76
      %p85 = scmp.eq.s32.totalorder %s26, 7
      %p86 = por %p84, %p85
      %p87 = scmp.ne.s32.totalorder %s76, %s77
      %p88 = scmp.eq.s32.totalorder %s26, 0
      %p89 = por %p87, %p88
      %p90 = scmp.ne.s32.totalorder %s76, %s77
      %p91 = scmp.eq.s32.totalorder %s27, 7
      %p92 = por %p90, %p91
      %p94 = scmp.ne.s32.totalorder %s77, %s93
      %p95 = scmp.eq.s32.totalorder %s27, 0
      %p96 = por %p94, %p95
      %s97 = ssub.s32 %s28, %s40
      %s98 = ssub.s32 %s29, %s36
      %s99 = sor.u32 %s97, %s98
      %p100 = scmp.eq.s32.totalorder %s99, 0
      %s102 = sadd.s32 %s101, 1
      %s103 = scalar_select %p100, %s101, %s102
      %p106 = pneg %p100
      %p107 = scmp.eq.s32.totalorder %s21, 7
      %p108 = por %p106, %p107
      %p109 = scmp.ne.s32.totalorder %s101, %s104
      %p110 = scmp.eq.s32.totalorder %s21, 0
      %p111 = por %p109, %p110
      %p112 = scmp.ne.s32.totalorder %s101, %s104
      %p113 = scmp.eq.s32.totalorder %s26, 7
      %p114 = por %p112, %p113
      %p115 = scmp.ne.s32.totalorder %s104, %s105
      %p116 = scmp.eq.s32.totalorder %s26, 0
      %p117 = por %p115, %p116
      %p118 = scmp.ne.s32.totalorder %s104, %s105
      %p119 = scmp.eq.s32.totalorder %s27, 7
      %p120 = por %p118, %p119
      %p122 = scmp.ne.s32.totalorder %s105, %s121
      %p123 = scmp.eq.s32.totalorder %s27, 0
      %p124 = por %p122, %p123
      %s125 = ssub.s32 %s28, %s40
      %s126 = ssub.s32 %s29, %s36
      %s127 = sor.u32 %s125, %s126
      %p128 = scmp.eq.s32.totalorder %s127, 0
      %s130 = sadd.s32 %s129, 1
      %s131 = scalar_select %p128, %s129, %s130
      %p134 = pneg %p128
      %p135 = scmp.eq.s32.totalorder %s21, 7
      %p136 = por %p134, %p135
      %p137 = scmp.ne.s32.totalorder %s129, %s132
      %p138 = scmp.eq.s32.totalorder %s21, 0
      %p139 = por %p137, %p138
      %p140 = scmp.ne.s32.totalorder %s129, %s132
      %p141 = scmp.eq.s32.totalorder %s26, 7
      %p142 = por %p140, %p141
      %p143 = scmp.ne.s32.totalorder %s132, %s133
      %p144 = scmp.eq.s32.totalorder %s26, 0
      %p145 = por %p143, %p144
      %p146 = scmp.ne.s32.totalorder %s132, %s133
      %p147 = scmp.eq.s32.totalorder %s27, 7
      %p148 = por %p146, %p147
      %p150 = scmp.ne.s32.totalorder %s133, %s149
      %p151 = scmp.eq.s32.totalorder %s27, 0
      %p152 = por %p150, %p151
      %s153 = ssub.s32 %s28, %s40
      %s154 = ssub.s32 %s29, %s36
      %s155 = sor.u32 %s153, %s154
      %p156 = scmp.eq.s32.totalorder %s155, 0
      %s158 = sadd.s32 %s157, 1
      %s159 = scalar_select %p156, %s157, %s158
      %p162 = pneg %p156
      %p163 = scmp.eq.s32.totalorder %s21, 7
      %p164 = por %p162, %p163
      %p165 = scmp.ne.s32.totalorder %s157, %s160
      %p166 = scmp.eq.s32.totalorder %s21, 0
      %p167 = por %p165, %p166
      %p168 = scmp.ne.s32.totalorder %s157, %s160
      %p169 = scmp.eq.s32.totalorder %s26, 7
      %p170 = por %p168, %p169
      %p171 = scmp.ne.s32.totalorder %s160, %s161
      %p172 = scmp.eq.s32.totalorder %s26, 0
      %p173 = por %p171, %p172
      %p174 = scmp.ne.s32.totalorder %s160, %s161
      %p175 = scmp.eq.s32.totalorder %s27, 7
      %p176 = por %p174, %p175
      %p178 = scmp.ne.s32.totalorder %s161, %s177
      %p179 = scmp.eq.s32.totalorder %s27, 0
      %p180 = por %p178, %p179
      %s181 = ssub.s32 %s28, %s40
      %p182 = scmp.eq.s32.totalorder %s181, 0
      %s184 = sadd.s32 %s183, 1
      %s185 = scalar_select %p182, %s183, %s184
      %p188 = pneg %p182
      %p189 = scmp.eq.s32.totalorder %s21, 7
      %p190 = por %p188, %p189
      %p191 = scmp.ne.s32.totalorder %s183, %s186
      %p192 = scmp.eq.s32.totalorder %s21, 0
      %p193 = por %p191, %p192
      %p194 = scmp.ne.s32.totalorder %s183, %s186
      %p195 = scmp.eq.s32.totalorder %s26, 7
      %p196 = por %p194, %p195
      %p197 = scmp.ne.s32.totalorder %s186, %s187
      %p198 = scmp.eq.s32.totalorder %s26, 0
      %p199 = por %p197, %p198
      %p200 = scmp.ne.s32.totalorder %s186, %s187
      %p201 = scmp.eq.s32.totalorder %s27, 7
      %p202 = por %p200, %p201
      %p204 = scmp.ne.s32.totalorder %s187, %s203
      %p205 = scmp.eq.s32.totalorder %s27, 0
      %p206 = por %p204, %p205
      %s207 = ssub.s32 %s28, %s40
      %p208 = scmp.eq.s32.totalorder %s207, 0
      %s210 = sadd.s32 %s209, 1
      %s211 = scalar_select %p208, %s209, %s210
      %p214 = pneg %p208
      %p215 = scmp.eq.s32.totalorder %s21, 7
      %p216 = por %p214, %p215
      %p217 = scmp.ne.s32.totalorder %s209, %s212
      %p218 = scmp.eq.s32.totalorder %s21, 0
      %p219 = por %p217, %p218
      %p220 = scmp.ne.s32.totalorder %s209, %s212
      %p221 = scmp.eq.s32.totalorder %s26, 7
      %p222 = por %p220, %p221
      %p223 = scmp.ne.s32.totalorder %s212, %s213
      %p224 = scmp.eq.s32.totalorder %s26, 0
      %p225 = por %p223, %p224
      %p226 = scmp.ne.s32.totalorder %s212, %s213
      %p227 = scmp.eq.s32.totalorder %s27, 7
      %p228 = por %p226, %p227
      %p230 = scmp.ne.s32.totalorder %s213, %s229
      %p231 = scmp.eq.s32.totalorder %s27, 0
      %p232 = por %p230, %p231
      %p233 = scmp.le.s32.totalorder 1, %s21
      %p234 = scmp.lt.s32.totalorder %s21, 9
      %p235 = pnand %p233, %p234
      %p236 = pneg %p235
      // Predicated region
      $region9: #{mixture_nb_loss.1} parent=5 // pred_check
        _
      $region10: #{mixture_nb_loss.1} parent=5 // pred_check_branch
        %238 = sbr.rel (%p235) target = $region12
      $region11: #{mixture_nb_loss.1} parent=5 // pred_region
        %s239 = ssub.s32 %s21, 1
      $region12: #{mixture_nb_loss.1} parent=5 // pred_fallthru
        _
      %p240 = scmp.lt.s32.totalorder %s21, 8
      // Predicated region
      $region13: #{mixture_nb_loss.1} parent=5 // pred_check
        %p241 = pneg %p240
      $region14: #{mixture_nb_loss.1} parent=5 // pred_check_branch
        %243 = sbr.rel (%p241) target = $region16
      $region15: #{mixture_nb_loss.1} parent=5 // pred_region
        // Predicated region
        $region17: #{mixture_nb_loss.1} parent=15 // pred_check
          %p244 = pneg %p55
        $region18: #{mixture_nb_loss.1} parent=15 // pred_check_branch
          %246 = sbr.rel (%p244) target = $region20
        $region19: #{mixture_nb_loss.1} parent=15 // pred_region
          %s247 = sand.u32 %s45, 1
          %s248 = scalar_lea.sflag [#allocation3], %s247
          %s249 = sand.u32 %s45, 1
          %s250 = smul.addr %s249, 8
          %s251 = scalar_lea.vmem [#allocation2], %s250
          %253 = vsyncadd %s248, 0
          %s254 = smul.addr %s28, 4
          %s255 = sadd.s32 %s29, %s254
          %s256 = smul.addr %s255, 8
          %s257 = scalar_lea.hbm %s0, %s256
          %s259 = sshll.u32 %s257, 4
          %s260 = int_to_ptr.hbm [resolvable:$true] %s259
          %s261 = sshll.u32 %s251, 4
          %s262 = int_to_ptr.vmem [resolvable:$true] %s261
          %264 = dma.hbm_to_vmem [thread:$0]  %s260, 128, %s262, %s248
        $region20: #{mixture_nb_loss.1} parent=15 // pred_fallthru
          _
        // Predicated region
        $region21: #{mixture_nb_loss.1} parent=15 // pred_check
          %p265 = pneg %p83
        $region22: #{mixture_nb_loss.1} parent=15 // pred_check_branch
          %267 = sbr.rel (%p265) target = $region24
        $region23: #{mixture_nb_loss.1} parent=15 // pred_region
          %s268 = sand.u32 %s21, 1
          %s269 = scalar_lea.sflag [#allocation5], %s268
          %s270 = sand.u32 %s73, 1
          %s271 = smul.addr %s270, 8
          %s272 = scalar_lea.vmem [#allocation4], %s271
          %274 = vsyncadd %s269, 0
          %s275 = smul.addr %s28, 4
          %s276 = sadd.s32 %s29, %s275
          %s277 = smul.addr %s276, 8
          %s278 = scalar_lea.hbm %s1, %s277
          %s280 = sshll.u32 %s278, 4
          %s281 = int_to_ptr.hbm [resolvable:$true] %s280
          %s282 = sshll.u32 %s272, 4
          %s283 = int_to_ptr.vmem [resolvable:$true] %s282
          %285 = dma.hbm_to_vmem [thread:$0]  %s281, 128, %s283, %s269
        $region24: #{mixture_nb_loss.1} parent=15 // pred_fallthru
          _
        // Predicated region
        $region25: #{mixture_nb_loss.1} parent=15 // pred_check
          %p286 = pneg %p111
        $region26: #{mixture_nb_loss.1} parent=15 // pred_check_branch
          %288 = sbr.rel (%p286) target = $region28
        $region27: #{mixture_nb_loss.1} parent=15 // pred_region
          %s289 = sand.u32 %s21, 1
          %s290 = scalar_lea.sflag [#allocation5], %s289
          %s291 = sand.u32 %s101, 1
          %s292 = smul.addr %s291, 8
          %s293 = scalar_lea.vmem [#allocation6], %s292
          %295 = vsyncadd %s290, 0
          %s296 = smul.addr %s28, 4
          %s297 = sadd.s32 %s29, %s296
          %s298 = smul.addr %s297, 8
          %s299 = scalar_lea.hbm %s2, %s298
          %s301 = sshll.u32 %s299, 4
          %s302 = int_to_ptr.hbm [resolvable:$true] %s301
          %s303 = sshll.u32 %s293, 4
          %s304 = int_to_ptr.vmem [resolvable:$true] %s303
          %306 = dma.hbm_to_vmem [thread:$0]  %s302, 128, %s304, %s290
        $region28: #{mixture_nb_loss.1} parent=15 // pred_fallthru
          _
        // Predicated region
        $region29: #{mixture_nb_loss.1} parent=15 // pred_check
          %p307 = pneg %p139
        $region30: #{mixture_nb_loss.1} parent=15 // pred_check_branch
          %309 = sbr.rel (%p307) target = $region32
        $region31: #{mixture_nb_loss.1} parent=15 // pred_region
          %s310 = sand.u32 %s21, 1
          %s311 = scalar_lea.sflag [#allocation8], %s310
          %s312 = sand.u32 %s129, 1
          %s313 = smul.addr %s312, 8
          %s314 = scalar_lea.vmem [#allocation7], %s313
          %316 = vsyncadd %s311, 0
          %s317 = smul.addr %s28, 4
          %s318 = sadd.s32 %s29, %s317
          %s319 = smul.addr %s318, 8
          %s320 = scalar_lea.hbm %s3, %s319
          %s322 = sshll.u32 %s320, 4
          %s323 = int_to_ptr.hbm [resolvable:$true] %s322
          %s324 = sshll.u32 %s314, 4
          %s325 = int_to_ptr.vmem [resolvable:$true] %s324
          %327 = dma.hbm_to_vmem [thread:$0]  %s323, 128, %s325, %s311
        $region32: #{mixture_nb_loss.1} parent=15 // pred_fallthru
          _
        // Predicated region
        $region33: #{mixture_nb_loss.1} parent=15 // pred_check
          %p328 = pneg %p167
        $region34: #{mixture_nb_loss.1} parent=15 // pred_check_branch
          %330 = sbr.rel (%p328) target = $region36
        $region35: #{mixture_nb_loss.1} parent=15 // pred_region
          %s331 = sand.u32 %s21, 1
          %s332 = scalar_lea.sflag [#allocation8], %s331
          %s333 = sand.u32 %s157, 1
          %s334 = smul.addr %s333, 8
          %s335 = scalar_lea.vmem [#allocation9], %s334
          %337 = vsyncadd %s332, 0
          %s338 = smul.addr %s28, 4
          %s339 = sadd.s32 %s29, %s338
          %s340 = smul.addr %s339, 8
          %s341 = scalar_lea.hbm %s4, %s340
          %s343 = sshll.u32 %s341, 4
          %s344 = int_to_ptr.hbm [resolvable:$true] %s343
          %s345 = sshll.u32 %s335, 4
          %s346 = int_to_ptr.vmem [resolvable:$true] %s345
          %348 = dma.hbm_to_vmem [thread:$0]  %s344, 128, %s346, %s332
        $region36: #{mixture_nb_loss.1} parent=15 // pred_fallthru
          _
        // Predicated region
        $region37: #{mixture_nb_loss.1} parent=15 // pred_check
          %p349 = pneg %p193
        $region38: #{mixture_nb_loss.1} parent=15 // pred_check_branch
          %351 = sbr.rel (%p349) target = $region40
        $region39: #{mixture_nb_loss.1} parent=15 // pred_region
          %p352 = scmp.lt.s32.totalorder %s28, 1
          %s353 = scalar_select %p352, %s28, 1
          %s354 = smul.addr %s353, 8
          %s355 = scalar_lea.vmem %s5, %s354
        $region40: #{mixture_nb_loss.1} parent=15 // pred_fallthru
          _
      $region16: #{mixture_nb_loss.1} parent=5 // pred_fallthru
        _
      %p356 = scmp.le.s32.totalorder 1, %s21
      %p357 = scmp.lt.s32.totalorder %s21, 9
      %p358 = pnand %p356, %p357
      %p359 = pneg %p358
      // Predicated region
      $region41: #{mixture_nb_loss.1} parent=5 // pred_check
        _
      $region42: #{mixture_nb_loss.1} parent=5 // pred_check_branch
        %361 = sbr.rel (%p358) target = $region44
      $region43: #{mixture_nb_loss.1} parent=5 // pred_region
        %s362 = ssub.s32 %s21, 1
        %s363 = sand.u32 %s48, 1
        %s364 = scalar_lea.sflag [#allocation3], %s363
        %s365 = sand.u32 %s48, 1
        %s366 = smul.addr %s365, 8
        %s367 = scalar_lea.vmem [#allocation2], %s366
        // Predicated region
        $region45: #{mixture_nb_loss.1} parent=43 // pred_check
          %p368 = pneg %p61
        $region46: #{mixture_nb_loss.1} parent=43 // pred_check_branch
          %370 = sbr.rel (%p368) target = $region48
        $region47: #{mixture_nb_loss.1} parent=43 // pred_region
          %372 = dma.done %s364, 128
        $region48: #{mixture_nb_loss.1} parent=43 // pred_fallthru
          _
        %s373 = sand.u32 %s26, 1
        %s374 = scalar_lea.sflag [#allocation5], %s373
        %s375 = sand.u32 %s76, 1
        %s376 = smul.addr %s375, 8
        %s377 = scalar_lea.vmem [#allocation4], %s376
        // Predicated region
        $region49: #{mixture_nb_loss.1} parent=43 // pred_check
          %p378 = pneg %p89
        $region50: #{mixture_nb_loss.1} parent=43 // pred_check_branch
          %380 = sbr.rel (%p378) target = $region52
        $region51: #{mixture_nb_loss.1} parent=43 // pred_region
          %382 = dma.done %s374, 128
        $region52: #{mixture_nb_loss.1} parent=43 // pred_fallthru
          _
        %s383 = sand.u32 %s26, 1
        %s384 = scalar_lea.sflag [#allocation5], %s383
        %s385 = sand.u32 %s104, 1
        %s386 = smul.addr %s385, 8
        %s387 = scalar_lea.vmem [#allocation6], %s386
        // Predicated region
        $region53: #{mixture_nb_loss.1} parent=43 // pred_check
          %p388 = pneg %p117
        $region54: #{mixture_nb_loss.1} parent=43 // pred_check_branch
          %390 = sbr.rel (%p388) target = $region56
        $region55: #{mixture_nb_loss.1} parent=43 // pred_region
          %392 = dma.done %s384, 128
        $region56: #{mixture_nb_loss.1} parent=43 // pred_fallthru
          _
        %s393 = sand.u32 %s26, 1
        %s394 = scalar_lea.sflag [#allocation8], %s393
        %s395 = sand.u32 %s132, 1
        %s396 = smul.addr %s395, 8
        %s397 = scalar_lea.vmem [#allocation7], %s396
        // Predicated region
        $region57: #{mixture_nb_loss.1} parent=43 // pred_check
          %p398 = pneg %p145
        $region58: #{mixture_nb_loss.1} parent=43 // pred_check_branch
          %400 = sbr.rel (%p398) target = $region60
        $region59: #{mixture_nb_loss.1} parent=43 // pred_region
          %402 = dma.done %s394, 128
        $region60: #{mixture_nb_loss.1} parent=43 // pred_fallthru
          _
        %s403 = sand.u32 %s26, 1
        %s404 = scalar_lea.sflag [#allocation8], %s403
        %s405 = sand.u32 %s160, 1
        %s406 = smul.addr %s405, 8
        %s407 = scalar_lea.vmem [#allocation9], %s406
        // Predicated region
        $region61: #{mixture_nb_loss.1} parent=43 // pred_check
          %p408 = pneg %p173
        $region62: #{mixture_nb_loss.1} parent=43 // pred_check_branch
          %410 = sbr.rel (%p408) target = $region64
        $region63: #{mixture_nb_loss.1} parent=43 // pred_region
          %412 = dma.done %s404, 128
        $region64: #{mixture_nb_loss.1} parent=43 // pred_fallthru
          _
        %s413 = sand.u32 %s48, 1
        %s414 = scalar_lea.sflag [#allocation3], %s413
        %s415 = sand.u32 %s48, 1
        %s416 = smul.addr %s415, 8
        %s417 = scalar_lea.vmem [#allocation2], %s416
        %p418 = pneg %p61
        %p419 = pneg %p58
        %s420 = sand.u32 %s26, 1
        %s421 = scalar_lea.sflag [#allocation5], %s420
        %s422 = sand.u32 %s76, 1
        %s423 = smul.addr %s422, 8
        %s424 = scalar_lea.vmem [#allocation4], %s423
        %p425 = pneg %p89
        %p426 = pneg %p86
        %s427 = sand.u32 %s26, 1
        %s428 = scalar_lea.sflag [#allocation5], %s427
        %s429 = sand.u32 %s104, 1
        %s430 = smul.addr %s429, 8
        %s431 = scalar_lea.vmem [#allocation6], %s430
        %p432 = pneg %p117
        %p433 = pneg %p114
        %s434 = sand.u32 %s26, 1
        %s435 = scalar_lea.sflag [#allocation8], %s434
        %s436 = sand.u32 %s132, 1
        %s437 = smul.addr %s436, 8
        %s438 = scalar_lea.vmem [#allocation7], %s437
        %p439 = pneg %p145
        %p440 = pneg %p142
        %s441 = sand.u32 %s26, 1
        %s442 = scalar_lea.sflag [#allocation8], %s441
        %s443 = sand.u32 %s160, 1
        %s444 = smul.addr %s443, 8
        %s445 = scalar_lea.vmem [#allocation9], %s444
        %p446 = pneg %p173
        %p447 = pneg %p170
        %p448 = scmp.lt.s32.totalorder %s30, 1
        %s449 = scalar_select %p448, %s30, 1
        %s450 = smul.addr %s449, 8
        %s451 = scalar_lea.vmem %s5, %s450
        %p452 = pneg %p199
        %p453 = pneg %p196
        %p454 = pneg %p225
        %p455 = pneg %p222
        %p456 = scmp.lt.s32.totalorder %s30, 1
        %s457 = scalar_select %p456, %s30, 1
        %s458 = smul.addr %s457, 8
        %s459 = scalar_lea.vmem %s6, %s458
        %p460 = scmp.lt.s32.totalorder %s30, 1
        %s461 = scalar_select %p460, %s30, 1
        %s462 = smul.addr %s461, 8
        %s463 = scalar_lea.vmem %s5, %s462
        %p464 = scmp.lt.s32.totalorder %s30, 1
        %s465 = scalar_select %p464, %s30, 1
        %s466 = smul.addr %s465, 8
        %s467 = scalar_lea.vmem %s6, %s466
        %p468 = scmp.eq.s32.totalorder %s31, 0
        // Predicated region
        $region65: #{mixture_nb_loss.1} parent=43 // pred_check
          %p469 = pneg %p468
        $region66: #{mixture_nb_loss.1} parent=43 // pred_check_branch
          %471 = sbr.rel (%p469) target = $region68
        $region67: #{mixture_nb_loss.1} parent=43 // pred_region
          %vm472 = vcmask 7168
          %473 = vst.msk [vmem:[%s467] sm:$0xff] %vm472, 0.0
        $region68: #{mixture_nb_loss.1} parent=43 // pred_fallthru
          _
        %v474 = vld [vmem:[%s367] sm:$0xff]
        %v475 = vld [vmem:[%s463] sm:$0xff]
        %v476 = vld [vmem:[%s377] sm:$0xff]
        %478 = vset.pattern.permute.xlu0 0
        %479 = vperm.xlu0 %478, %v475
        %v480 = vpop.permute.xlu0 %479
        %v482 = vmul.f32 %v476, %v480
        %v483 = vld [vmem:[%s387] sm:$0xff]
        %v484 = vmul.f32 %v483, %v480
        %v485 = vld [vmem:[%s397] sm:$0xff]
        %v486 = vld [vmem:[%s407] sm:$0xff]
        %v487 = vadd.f32 %v485, 1e-10
        %v488 = vlog2.pop %v487
        %v489 = vmul.f32 %v488, 0.6931472
        %v490 = vsub.f32 %v487, 1.0
        %v491 = vadd.f32 %v490, 60.458332
        %v492 = vmul.f32 %v491, %v490
        %v493 = vadd.f32 %v492, 1599.0425
        %v494 = vmul.f32 %v493, %v490
        %v495 = vadd.f32 %v494, 24165.51
        %v496 = vmul.f32 %v495, %v490
        %v497 = vadd.f32 %v496, 228235.22
        %v498 = vmul.f32 %v497, %v490
        %v499 = vadd.f32 %v498, 1379496.3
        %v500 = vmul.f32 %v499, %v490
        %v501 = vadd.f32 %v500, 5210869.0
        %v502 = vmul.f32 %v501, %v490
        %v503 = vadd.f32 %v502, 11246929.0
        %v504 = vmul.f32 %v503, %v490
        %v505 = vadd.f32 %v504, 10619610.0
        %v506 = vadd.f32 %v490, 36.0
        %v507 = vmul.f32 %v506, %v490
        %v508 = vadd.f32 %v507, 546.0
        %v509 = vmul.f32 %v508, %v490
        %v510 = vadd.f32 %v509, 4536.0
        %v511 = vmul.f32 %v510, %v490
        %v512 = vadd.f32 %v511, 22449.0
        %v513 = vmul.f32 %v512, %v490
        %v514 = vadd.f32 %v513, 67284.0
        %v515 = vmul.f32 %v514, %v490
        %v516 = vadd.f32 %v515, 118124.0
        %v517 = vmul.f32 %v516, %v490
        %v518 = vadd.f32 %v517, 109584.0
        %v519 = vmul.f32 %v518, %v490
        %v520 = vadd.f32 %v519, 40320.0
        %v521 = vadd.f32 %v490, 7.5
        %v522 = vadd.f32 %v490, 0.5
        %v523 = vlog2.pop %v521
        %v524 = vmul.f32 %v523, 0.6931472
        %v525 = vmul.f32 %v522, %v524
        %v526 = vadd.f32 %v525, 0.9189385
        %v527 = vsub.f32 %v526, %v521
        %v528 = vlog2.pop %v505
        %v529 = vmul.f32 %v528, 0.6931472
        %v530 = vadd.f32 %v527, %v529
        %v531 = vlog2.pop %v520
        %v532 = vmul.f32 %v531, 0.6931472
        %v533 = vsub.f32 %v530, %v532
        %v534 = vadd.f32 %v474, 1.0
        %v535 = vsub.f32 %v534, 1.0
        %v536 = vadd.f32 %v535, 60.458332
        %v537 = vmul.f32 %v536, %v535
        %v538 = vadd.f32 %v537, 1599.0425
        %v539 = vmul.f32 %v538, %v535
        %v540 = vadd.f32 %v539, 24165.51
        %v541 = vmul.f32 %v540, %v535
        %v542 = vadd.f32 %v541, 228235.22
        %v543 = vmul.f32 %v542, %v535
        %v544 = vadd.f32 %v543, 1379496.3
        %v545 = vmul.f32 %v544, %v535
        %v546 = vadd.f32 %v545, 5210869.0
        %v547 = vmul.f32 %v546, %v535
        %v548 = vadd.f32 %v547, 11246929.0
        %v549 = vmul.f32 %v548, %v535
        %v550 = vadd.f32 %v549, 10619610.0
        %v551 = vadd.f32 %v535, 36.0
        %v552 = vmul.f32 %v551, %v535
        %v553 = vadd.f32 %v552, 546.0
        %v554 = vmul.f32 %v553, %v535
        %v555 = vadd.f32 %v554, 4536.0
        %v556 = vmul.f32 %v555, %v535
        %v557 = vadd.f32 %v556, 22449.0
        %v558 = vmul.f32 %v557, %v535
        %v559 = vadd.f32 %v558, 67284.0
        %v560 = vmul.f32 %v559, %v535
        %v561 = vadd.f32 %v560, 118124.0
        %v562 = vmul.f32 %v561, %v535
        %v563 = vadd.f32 %v562, 109584.0
        %v564 = vmul.f32 %v563, %v535
        %v565 = vadd.f32 %v564, 40320.0
        %v566 = vadd.f32 %v535, 7.5
        %v567 = vadd.f32 %v535, 0.5
        %v568 = vlog2.pop %v566
        %v569 = vmul.f32 %v568, 0.6931472
        %v570 = vmul.f32 %v567, %v569
        %v571 = vadd.f32 %v570, 0.9189385
        %v572 = vsub.f32 %v571, %v566
        %v573 = vlog2.pop %v550
        %v574 = vmul.f32 %v573, 0.6931472
        %v575 = vadd.f32 %v572, %v574
        %v576 = vlog2.pop %v565
        %v577 = vmul.f32 %v576, 0.6931472
        %v578 = vsub.f32 %v575, %v577
        %v579 = vadd.f32 %v533, %v578
        %v580 = vadd.f32 %v474, %v487
        %v581 = vsub.f32 %v580, 1.0
        %v582 = vadd.f32 %v581, 60.458332
        %v583 = vmul.f32 %v582, %v581
        %v584 = vadd.f32 %v583, 1599.0425
        %v585 = vmul.f32 %v584, %v581
        %v586 = vadd.f32 %v585, 24165.51
        %v587 = vmul.f32 %v586, %v581
        %v588 = vadd.f32 %v587, 228235.22
        %v589 = vmul.f32 %v588, %v581
        %v590 = vadd.f32 %v589, 1379496.3
        %v591 = vmul.f32 %v590, %v581
        %v592 = vadd.f32 %v591, 5210869.0
        %v593 = vmul.f32 %v592, %v581
        %v594 = vadd.f32 %v593, 11246929.0
        %v595 = vmul.f32 %v594, %v581
        %v596 = vadd.f32 %v595, 10619610.0
        %v597 = vadd.f32 %v581, 36.0
        %v598 = vmul.f32 %v597, %v581
        %v599 = vadd.f32 %v598, 546.0
        %v600 = vmul.f32 %v599, %v581
        %v601 = vadd.f32 %v600, 4536.0
        %v602 = vmul.f32 %v601, %v581
        %v603 = vadd.f32 %v602, 22449.0
        %v604 = vmul.f32 %v603, %v581
        %v605 = vadd.f32 %v604, 67284.0
        %v606 = vmul.f32 %v605, %v581
        %v607 = vadd.f32 %v606, 118124.0
        %v608 = vmul.f32 %v607, %v581
        %v609 = vadd.f32 %v608, 109584.0
        %v610 = vmul.f32 %v609, %v581
        %v611 = vadd.f32 %v610, 40320.0
        %v612 = vadd.f32 %v581, 7.5
        %v613 = vadd.f32 %v581, 0.5
        %v614 = vlog2.pop %v612
        %v615 = vmul.f32 %v614, 0.6931472
        %v616 = vmul.f32 %v613, %v615
        %v617 = vadd.f32 %v616, 0.9189385
        %v618 = vsub.f32 %v617, %v612
        %v619 = vlog2.pop %v596
        %v620 = vmul.f32 %v619, 0.6931472
        %v621 = vadd.f32 %v618, %v620
        %v622 = vlog2.pop %v611
        %v623 = vmul.f32 %v622, 0.6931472
        %v624 = vsub.f32 %v621, %v623
        %v625 = vsub.f32 %v579, %v624
        %v626 = vadd.f32 %v485, %v474
        %v627 = vadd.f32 %v487, %v482
        %v628 = vlog2.pop %v627
        %v629 = vmul.f32 %v628, 0.6931472
        %v630 = vsub.f32 %v629, %v489
        %v631 = vmul.f32 %v626, %v630
        %v632 = vadd.f32 %v482, 1e-10
        %v633 = vlog2.pop %v632
        %v634 = vmul.f32 %v633, 0.6931472
        %v635 = vsub.f32 %v489, %v634
        %v636 = vmul.f32 %v474, %v635
        %v637 = vadd.f32 %v631, %v636
        %v638 = vadd.f32 %v487, %v484
        %v639 = vlog2.pop %v638
        %v640 = vmul.f32 %v639, 0.6931472
        %v641 = vsub.f32 %v640, %v489
        %v642 = vmul.f32 %v626, %v641
        %v643 = vadd.f32 %v484, 1e-10
        %v644 = vlog2.pop %v643
        %v645 = vmul.f32 %v644, 0.6931472
        %v646 = vsub.f32 %v489, %v645
        %v647 = vmul.f32 %v474, %v646
        %v648 = vadd.f32 %v642, %v647
        %v649 = vsub.f32 0.0, %v637
        %v650 = vsub.f32 0.0, %v648
        %v651 = vsub.f32 %v650, %v486
        %v652 = vmax.f32 %v649, %v651
        %v653 = vsub.f32 %v649, %v651
        %v654 = vand.u32 2147483647, %v653
        %v655 = vsub.f32 0.0, %v654
        %v656 = vmul.f32 %v655, 1.442695
        %v657 = vpow.pop %v656
        %v658 = vadd.f32 %v657, 1.0
        %v659 = vlog2.pop %v658
        %v660 = vmul.f32 %v659, 0.6931472
        %v661 = vmul.f32 -0.5, %v657
        %v662 = vadd.f32 %v661, 1.0
        %v663 = vmul.f32 %v662, %v657
        %v664 = vand.u32 2147483647, %v657
        %vm665 = vcmp.lt.f32.partialorder %v664, 0.0004427343
        %v666 = vsel %vm665, %v663, %v660
        %v667 = vadd.f32 %v652, %v666
        %v668 = vsub.f32 %v667, %v625
        %v669 = vsub.f32 0.0, %v486
        %v670 = vmax.f32 %v669, 0.0
        %v671 = vand.u32 2147483647, %v486
        %v672 = vsub.f32 0.0, %v671
        %v673 = vmul.f32 %v672, 1.442695
        %v674 = vpow.pop %v673
        %v675 = vadd.f32 %v674, 1.0
        %v676 = vlog2.pop %v675
        %v677 = vmul.f32 %v676, 0.6931472
        %v678 = vmul.f32 -0.5, %v674
        %v679 = vadd.f32 %v678, 1.0
        %v680 = vmul.f32 %v679, %v674
        %v681 = vand.u32 2147483647, %v674
        %vm682 = vcmp.lt.f32.partialorder %v681, 0.0004427343
        %v683 = vsel %vm682, %v680, %v677
        %v684 = vadd.f32 %v670, %v683
        %v685 = vsub.f32 %v684, %v668
        %v686 = vld [vmem:[%s467] sm:$0xff]
        %687 = vadd.xlane.f32.xlu0 %v685
        %v688 = vpop.xlane.xlu0 %687
        %v689 = vadd.f32 %v686, %v688
        %vm690 = vcmask 7168
        %691 = vst.msk [vmem:[%s467] sm:$0xff] %vm690, %v689
        %p692 = scmp.lt.s32.totalorder %s30, 1
        %s693 = scalar_select %p692, %s30, 1
        %s694 = smul.addr %s693, 8
        %s695 = scalar_lea.vmem %s6, %s694
        // Predicated region
        $region69: #{mixture_nb_loss.1} parent=43 // pred_check
          %p696 = pneg %p222
        $region70: #{mixture_nb_loss.1} parent=43 // pred_check_branch
          %698 = sbr.rel (%p696) target = $region72
        $region71: #{mixture_nb_loss.1} parent=43 // pred_region
          _
        $region72: #{mixture_nb_loss.1} parent=43 // pred_fallthru
          _
      $region44: #{mixture_nb_loss.1} parent=5 // pred_fallthru
        _
      %p699 = scmp.le.s32.totalorder 2, %s21
      // Predicated region
      $region73: #{mixture_nb_loss.1} parent=5 // pred_check
        %p700 = pneg %p699
      $region74: #{mixture_nb_loss.1} parent=5 // pred_check_branch
        %702 = sbr.rel (%p700) target = $region76
      $region75: #{mixture_nb_loss.1} parent=5 // pred_region
        %s703 = ssub.s32 %s21, 2
        // Predicated region
        $region77: #{mixture_nb_loss.1} parent=75 // pred_check
          %p704 = pneg %p228
        $region78: #{mixture_nb_loss.1} parent=75 // pred_check_branch
          %706 = sbr.rel (%p704) target = $region80
        $region79: #{mixture_nb_loss.1} parent=75 // pred_region
          %p707 = scmp.lt.s32.totalorder %s32, 1
          %s708 = scalar_select %p707, %s32, 1
          %s709 = smul.addr %s708, 8
          %s710 = scalar_lea.vmem %s6, %s709
        $region80: #{mixture_nb_loss.1} parent=75 // pred_fallthru
          _
      $region76: #{mixture_nb_loss.1} parent=5 // pred_fallthru
        _
    $region6: #{mixture_nb_loss.1} parent=1 // loop_footer
      %s25 = sadd.s32 1, %s21
    $region7: #{mixture_nb_loss.1} parent=1 // loop_footer_branch
      %20 = sbr.rel target = $region3
    $region8: #{mixture_nb_loss.1} parent=1 // loop_exit
      _
    %711 = vsyncpa [#allocation3], 1
    %s712 = scalar_lea.sflag [#allocation3], 1
    %713 = vsyncpa %s712, 1
    %714 = vsyncpa [#allocation5], 1
    %s715 = scalar_lea.sflag [#allocation5], 1
    %716 = vsyncpa %s715, 1
    %717 = vsyncpa [#allocation8], 1
    %s718 = scalar_lea.sflag [#allocation8], 1
    %719 = vsyncpa %s718, 1

</llo_original>
